<compile_context>
chip_gen: v5e
topology: v5e:2x2
jax: 0.10.0
libtpu: 0.0.40
codegen_flags: <defaults>
</compile_context>

<pallas_src>
import jax
import jax.numpy as jnp
from jax import lax
from jax.experimental import pallas as pl
from jax.experimental.pallas import tpu as pltpu


def linear_kernel(x_ref, w_ref, b_ref, o_ref):
    # x_ref: (tm, K)       VMEM
    # w_ref: (N_pad, K)    VMEM  (PyTorch layout; contract on K = axis 1 of both)
    # b_ref: (1, N_pad)    VMEM
    # o_ref: (tm, N_pad)   VMEM  (lane-dense: N_pad % 128 == 0)
    acc = lax.dot_general(
        x_ref[...], w_ref[...],
        dimension_numbers=(((1,), (1,)), ((), ())),
        preferred_element_type=jnp.float32,
    )
    o_ref[...] = (acc + b_ref[...]).astype(o_ref.dtype)


def _round_up(n, m):
    return ((n + m - 1) // m) * m


def policy_lin_forward(x, weight, bias, *, tm=None):
    """Pallas equivalent of Policy_lin.forward: x @ weight.T + bias (f32)."""
    B, K = x.shape
    N = weight.shape[0]

    # Lane-dense output: pad N to a multiple of 128.
    N_pad = _round_up(N, 128)
    # Row tile: full MXU rows when batch is big, else sublane-aligned full batch.
    if tm is None:
        tm = 128 if B >= 128 else _round_up(max(B, 1), 8)
    B_pad = _round_up(B, tm)

    x_p = x if B_pad == B else jnp.pad(x, ((0, B_pad - B), (0, 0)))
    w_p = weight if N_pad == N else jnp.pad(weight, ((0, N_pad - N), (0, 0)))
    b_p = bias if N_pad == N else jnp.pad(bias, (0, N_pad - N))
    b2 = b_p.reshape(1, N_pad)

    out = pl.pallas_call(
        linear_kernel,
        out_shape=jax.ShapeDtypeStruct((B_pad, N_pad), jnp.float32),
        grid=(B_pad // tm,),
        in_specs=[
            pl.BlockSpec((tm, K), lambda i: (i, 0)),        # x: tiled over batch
            pl.BlockSpec((N_pad, K), lambda i: (0, 0)),     # W: resident
            pl.BlockSpec((1, N_pad), lambda i: (0, 0)),     # b: resident
        ],
        out_specs=pl.BlockSpec((tm, N_pad), lambda i: (i, 0)),
        compiler_params=pltpu.CompilerParams(
            dimension_semantics=("parallel",)),
    )(x_p, w_p, b2)

    return out[:B, :N]


if __name__ == "__main__":
    # Small shapes consistent with Policy_lin(num_inputs, num_outputs)
    B, num_inputs, num_outputs = 8, 32, 16

    key = jax.random.PRNGKey(0)
    kx, kw, kb = jax.random.split(key, 3)

    # Deterministic init mirroring Policy_lin.random_initialize():
    #   weight ~ U(-0.1, 0.1), bias ~ U(0.0, 1.0)
    weight = jax.random.uniform(kw, (num_outputs, num_inputs),
                                minval=-0.1, maxval=0.1, dtype=jnp.float32)
    bias = jax.random.uniform(kb, (num_outputs,),
                              minval=0.0, maxval=1.0, dtype=jnp.float32)

    x = jax.random.normal(kx, (B, num_inputs), dtype=jnp.float32)

    out = policy_lin_forward(x, weight, bias)
    out = jax.block_until_ready(out)

    # Reference check against plain JAX (same math as torch nn.Linear)
    ref = x @ weight.T + bias
    assert out.shape == (B, num_outputs)
    assert jnp.allclose(out, ref, atol=1e-5, rtol=1e-5)

    print("KERNEL_OK")
</pallas_src>

<mosaic_0001>
module attributes {stable_mosaic.version = 11 : i64} {
  func.func @linear_kernel(%arg0: i32, %arg1: memref<8x32xf32, #tpu.memory_space<vmem>>, %arg2: memref<128x32xf32, #tpu.memory_space<vmem>>, %arg3: memref<1x128xf32, #tpu.memory_space<vmem>>, %arg4: memref<8x128xf32, #tpu.memory_space<vmem>>) attributes {dimension_semantics = [#tpu.dimension_semantics<parallel>], iteration_bounds = array<i64: 1>, scalar_prefetch = 0 : i64, scratch_operands = 0 : i64, tpu.core_type = #tpu.core_type<tc>, window_params = [{transform_indices = @transform_0, window_bounds = array<i64: 8, 32>}, {pipeline_mode = #tpu.pipeline_mode<synchronous>, transform_indices = @transform_1, window_bounds = array<i64: 128, 32>}, {pipeline_mode = #tpu.pipeline_mode<synchronous>, transform_indices = @transform_2, window_bounds = array<i64: 1, 128>}, {transform_indices = @transform_3, window_bounds = array<i64: 8, 128>}]} {
    %c0 = arith.constant 0 : index
    %c0_0 = arith.constant 0 : index
    %0 = vector.load %arg1[%c0, %c0_0] : memref<8x32xf32, #tpu.memory_space<vmem>>, vector<8x32xf32>
    %c0_1 = arith.constant 0 : index
    %c0_2 = arith.constant 0 : index
    %1 = vector.load %arg2[%c0_1, %c0_2] : memref<128x32xf32, #tpu.memory_space<vmem>>, vector<128x32xf32>
    %cst = arith.constant dense<0.000000e+00> : vector<8x128xf32>
    %2 = tpu.matmul %0, %1, %cst {dimension_numbers = #tpu.dot_dimension_numbers<[1], [1], [0], [0], [0, 0, 1, 0], [], []>} : vector<8x32xf32>, vector<128x32xf32>, vector<8x128xf32> -> vector<8x128xf32>
    %c0_3 = arith.constant 0 : index
    %c0_4 = arith.constant 0 : index
    %3 = vector.load %arg3[%c0_3, %c0_4] : memref<1x128xf32, #tpu.memory_space<vmem>>, vector<1x128xf32>
    %4 = vector.broadcast %3 : vector<1x128xf32> to vector<8x128xf32>
    %5 = arith.addf %2, %4 : vector<8x128xf32>
    %c0_5 = arith.constant 0 : index
    %c0_6 = arith.constant 0 : index
    %6 = vector.load %arg4[%c0_5, %c0_6] : memref<8x128xf32, #tpu.memory_space<vmem>>, vector<8x128xf32>
    tpu.vector_store %arg4[%c0_5, %c0_6], %5 {strides = array<i32>} : memref<8x128xf32, #tpu.memory_space<vmem>>, vector<8x128xf32>,
    return
  }
  func.func @transform_0(%arg0: i32) -> (i32, i32) {
    %c0_i32 = arith.constant 0 : i32
    %c0_i32_0 = arith.constant 0 : i32
    return %arg0, %c0_i32 : i32, i32
  }
  func.func @transform_1(%arg0: i32) -> (i32, i32) {
    %c0_i32 = arith.constant 0 : i32
    %c0_i32_0 = arith.constant 0 : i32
    %c0_i32_1 = arith.constant 0 : i32
    return %c0_i32, %c0_i32_0 : i32, i32
  }
  func.func @transform_2(%arg0: i32) -> (i32, i32) {
    %c0_i32 = arith.constant 0 : i32
    %c0_i32_0 = arith.constant 0 : i32
    %c0_i32_1 = arith.constant 0 : i32
    return %c0_i32, %c0_i32_0 : i32, i32
  }
  func.func @transform_3(%arg0: i32) -> (i32, i32) {
    %c0_i32 = arith.constant 0 : i32
    %c0_i32_0 = arith.constant 0 : i32
    return %arg0, %c0_i32 : i32, i32
  }
}

</mosaic_0001>

<llo_original>
// kernel: tpu_custom_call.1
$region0: #{tpu_custom_call.1}
  #allocation0 [shape = 'u32[]', space=smem, size = 0x4, offset = 0x4, fixed_abs, tag = 'smem constant byte address 0x4 - core index']
  #allocation1 [shape = 'u32[72,128]{1,0:T(1,128)}', space=vmem, size = 0x9000, scoped, tag = 'internal scratch']
  %s0 = inlined_call_operand.vmem [shape: f32[8,32], index: 0, kind: input, shape index: {}]
  %s1 = inlined_call_operand.vmem [shape: f32[128,32], index: 1, kind: input, shape index: {}]
  %s2 = inlined_call_operand.vmem [shape: f32[1,128], index: 2, kind: input, shape index: {}]
  %s3 = inlined_call_operand.hbm [shape: f32[8,128], index: 3, kind: output, shape index: {}]
  %s4 = sld [smem:[#allocation0]]
  $region22: #{tpu_custom_call.1} parent=0
    _
  %s6 = ssub.s32 1, %s4
  %s7 = scalar_select 0, %s6, %s4
  $region1: #{tpu_custom_call.1} parent=0
    #allocation2 [shape = 'u8[4096]{0}', space=vmem, size = 0x1000, scoped, tag = 'output window, operand 0, single buffered']
    #allocation3 [shape = 's32[1]{0}', space=sflag, size = 0x4, scoped, tag = 'scoped memory for tpu_custom_call.1']
    %8 = vsyncpa [#allocation3], 0
    // Predicated region
    $region2: #{tpu_custom_call.1} parent=1 // pred_check
      _
    $region3: #{tpu_custom_call.1} parent=1 // pred_check_branch
      %10 = sbr.rel (0) target = $region5
    $region4: #{tpu_custom_call.1} parent=1 // pred_region
      _
    $region5: #{tpu_custom_call.1} parent=1 // pred_fallthru
      _
    // Predicated region
    $region6: #{tpu_custom_call.1} parent=1 // pred_check
      _
    $region7: #{tpu_custom_call.1} parent=1 // pred_check_branch
      %12 = sbr.rel (0) target = $region9
    $region8: #{tpu_custom_call.1} parent=1 // pred_region
      _
    $region9: #{tpu_custom_call.1} parent=1 // pred_fallthru
      _
    // Predicated region
    $region10: #{tpu_custom_call.1} parent=1 // pred_check
      _
    $region11: #{tpu_custom_call.1} parent=1 // pred_check_branch
      %14 = sbr.rel (0) target = $region13
    $region12: #{tpu_custom_call.1} parent=1 // pred_region
      _
    $region13: #{tpu_custom_call.1} parent=1 // pred_fallthru
      _
    %v15 = vld [vmem:[%s0] sm:$0xff]
    %v16 = vld [vmem:[%s1] sm:$0xff]
    %v17 = vld [vmem:[%s1 + $0x8] sm:$0xff]
    %v18 = vld [vmem:[%s1 + $0x10] sm:$0xff]
    %v19 = vld [vmem:[%s1 + $0x18] sm:$0xff]
    %v20 = vld [vmem:[%s1 + $0x20] sm:$0xff]
    %v21 = vld [vmem:[%s1 + $0x28] sm:$0xff]
    %v22 = vld [vmem:[%s1 + $0x30] sm:$0xff]
    %v23 = vld [vmem:[%s1 + $0x38] sm:$0xff]
    %v24 = vld [vmem:[%s1 + $0x40] sm:$0xff]
    %v25 = vld [vmem:[%s1 + $0x48] sm:$0xff]
    %v26 = vld [vmem:[%s1 + $0x50] sm:$0xff]
    %v27 = vld [vmem:[%s1 + $0x58] sm:$0xff]
    %v28 = vld [vmem:[%s1 + $0x60] sm:$0xff]
    %v29 = vld [vmem:[%s1 + $0x68] sm:$0xff]
    %v30 = vld [vmem:[%s1 + $0x70] sm:$0xff]
    %v31 = vld [vmem:[%s1 + $0x78] sm:$0xff]
    %v32 = vld [vmem:[%s2] sm:$0x1]
    %v34 = vperm.slane %v32, 0
    %vm36 = vcmask 261120
    %v38 = vsel %vm36, %v15, 0
    %v41 = vsel %vm36, %v16, 0
    %v44 = vsel %vm36, %v17, 0
    %v47 = vsel %vm36, %v18, 0
    %v50 = vsel %vm36, %v19, 0
    %v53 = vsel %vm36, %v20, 0
    %v56 = vsel %vm36, %v21, 0
    %v59 = vsel %vm36, %v22, 0
    %v62 = vsel %vm36, %v23, 0
    %v65 = vsel %vm36, %v24, 0
    %v68 = vsel %vm36, %v25, 0
    %v71 = vsel %vm36, %v26, 0
    %v74 = vsel %vm36, %v27, 0
    %v77 = vsel %vm36, %v28, 0
    %v80 = vsel %vm36, %v29, 0
    %v83 = vsel %vm36, %v30, 0
    %v86 = vsel %vm36, %v31, 0
    %88 = vmatpush.xpose.msra.mxu0 %v86
    %89 = vmatpush.xpose.msra.mxu0 %v83
    %90 = vmatpush.xpose.msra.mxu0 %v80
    %91 = vmatpush.xpose.msra.mxu0 %v77
    %92 = vmatpush.xpose.msra.mxu0 %v74
    %93 = vmatpush.xpose.msra.mxu0 %v71
    %94 = vmatpush.xpose.msra.mxu0 %v68
    %95 = vmatpush.xpose.msra.mxu0 %v65
    %96 = vmatpush.xpose.msra.mxu0 %v62
    %97 = vmatpush.xpose.msra.mxu0 %v59
    %98 = vmatpush.xpose.msra.mxu0 %v56
    %99 = vmatpush.xpose.msra.mxu0 %v53
    %100 = vmatpush.xpose.msra.mxu0 %v50
    %101 = vmatpush.xpose.msra.mxu0 %v47
    %102 = vmatpush.xpose.msra.mxu0 %v44
    %103 = vmatpush.xpose.msra.mxu0 %v41
    %104 = vmatmul.f32.gmra.mxu0 %v38
    %v105 = vpop.f32.mrf.mxu0
    %v106 = vadd.f32 %v34, %v105
    %107 = vdwg.mxu0
    %108 = vst [vmem:[#allocation2] sm:$0xff] %v106
    // Predicated region
    $region14: #{tpu_custom_call.1} parent=1 // pred_check
      _
    $region15: #{tpu_custom_call.1} parent=1 // pred_check_branch
      %110 = sbr.rel (0) target = $region17
    $region16: #{tpu_custom_call.1} parent=1 // pred_region
      %112 = vsyncadd [#allocation3], 0
      %s114 = sshll.u32 [#allocation2], 4
      %s115 = int_to_ptr.vmem [resolvable:$true] %s114
      %s116 = sshll.u32 %s3, 4
      %s117 = int_to_ptr.hbm [resolvable:$true] %s116
      %119 = dma.vmem_to_hbm [thread:$0]  %s115, 128, %s117, [#allocation3]
    $region17: #{tpu_custom_call.1} parent=1 // pred_fallthru
      _
    // Predicated region
    $region18: #{tpu_custom_call.1} parent=1 // pred_check
      _
    $region19: #{tpu_custom_call.1} parent=1 // pred_check_branch
      %121 = sbr.rel (0) target = $region21
    $region20: #{tpu_custom_call.1} parent=1 // pred_region
      %123 = dma.done [#allocation3], 128
    $region21: #{tpu_custom_call.1} parent=1 // pred_fallthru
      _
    %124 = vsyncpa [#allocation3], 1

</llo_original>
